<compile_context>
chip_gen: v7x
topology: tpu7x:2x2x1
jax: 0.10.0
libtpu: 0.0.40
codegen_flags: <defaults>
</compile_context>

<pallas_src>
import jax
import jax.numpy as jnp
from jax.experimental import pallas as pl
from jax.experimental.pallas import tpu as pltpu

HIDDEN = 32   # hidden_size
VOCAB = 16    # input_size (vocabulary)
SEQ = 8       # example sequence length


def gru_encoder_kernel(gi_seq_ref, wcat_ref, h0_ref, out_ref):
    """All S GRU steps in one invocation; hidden carried in vregs.

    gi_seq_ref : (S, 4H) f32  per-token fused input rows
                 [i_r+b_ir+b_hr | i_z+b_iz+b_hz | i_n+b_in | b_hn]
    wcat_ref   : (H, 4H) f32  [W_hr^T | W_hz^T | 0 | W_hn^T]
    h0_ref     : (1, H)  f32  initial hidden
    out_ref    : (S, H)  f32  hidden after each step (VMEM-resident,
                              written back once at kernel end)
    """
    H = wcat_ref.shape[0]
    S = gi_seq_ref.shape[0]

    w_cat = wcat_ref[...]          # (H, 4H) — loaded once, resident in vregs/VMEM
    h = h0_ref[...]                # (1, H)  — recurrent carry stays in registers

    # Fully unrolled static loop: only true cross-step dependence is `h`, so
    # the scheduler can overlap step t+1's gi load / step t-1's row store with
    # step t's sigmoid/tanh chain. Live ranges are tiny at H=32.
    for t in range(S):
        gi = gi_seq_ref[pl.ds(t, 1), :]                       # (1, 4H), static row
        pre = gi + jnp.dot(h, w_cat,
                           preferred_element_type=jnp.float32)  # (1, 4H) = 1 vreg
        r = jax.nn.sigmoid(pre[:, 0:H])
        z = jax.nn.sigmoid(pre[:, H:2 * H])
        n = jnp.tanh(pre[:, 2 * H:3 * H] + r * pre[:, 3 * H:4 * H])
        h = (1.0 - z) * n + z * h
        out_ref[pl.ds(t, 1), :] = h.astype(out_ref.dtype)     # static row store


def prepare_encoder_params(emb_table, w_ih, w_hh, b_ih, b_hh):
    """One-time parameter re-layout (do NOT call per token).

    gi_table[v] = [emb[v]@W_ir^T + b_ir + b_hr |
                   emb[v]@W_iz^T + b_iz + b_hz |
                   emb[v]@W_in^T + b_in        |
                   b_hn]                                   (V, 4H)
    w_hh_cat    = [W_hr^T | W_hz^T | 0 | W_hn^T]           (H, 4H)
    """
    V, H = emb_table.shape
    gi3 = (emb_table @ w_ih.T + b_ih).astype(jnp.float32)          # (V, 3H)
    gi_table = jnp.concatenate(
        [gi3[:, 0:H] + b_hh[0:H],                                   # pre_r bias-fused
         gi3[:, H:2 * H] + b_hh[H:2 * H],                           # pre_z bias-fused
         gi3[:, 2 * H:3 * H],                                       # i_n + b_in
         jnp.broadcast_to(b_hh[2 * H:3 * H], (V, H))],              # b_hn per row
        axis=1).astype(jnp.float32)                                 # (V, 4H)

    w_hh_t = jnp.transpose(w_hh).astype(jnp.float32)                # (H, 3H)
    w_hh_cat = jnp.concatenate(
        [w_hh_t[:, 0:H], w_hh_t[:, H:2 * H],
         jnp.zeros((H, H), jnp.float32), w_hh_t[:, 2 * H:3 * H]],
        axis=1).astype(jnp.float32)                                 # (H, 4H)
    return gi_table, w_hh_cat


@jax.jit
def _encode(tokens, hidden, gi_table, w_hh_cat):
    V, H4 = gi_table.shape
    H = w_hh_cat.shape[0]
    S = tokens.shape[0]

    # Embedding + input projection: one tiny XLA gather from the fused table
    # (clamped for OOB safety, like the previous version; nn.Embedding would
    # error instead).
    tok = jnp.clip(tokens.astype(jnp.int32), 0, V - 1)
    gi_seq = jnp.take(gi_table, tok, axis=0)                        # (S, 4H)
    h0 = hidden.astype(jnp.float32).reshape(1, H)

    cost = pl.CostEstimate(
        flops=S * (2 * H * H4 + 10 * H),
        transcendentals=S * 3 * H,
        bytes_accessed=4 * (S * H4 + H * H4 + H + S * H),
    )

    out = pl.pallas_call(
        gru_encoder_kernel,
        out_shape=jax.ShapeDtypeStruct((S, H), jnp.float32),
        cost_estimate=cost,
    )(gi_seq, w_hh_cat, h0)                                         # (S, H)

    outs = out.reshape(S, 1, H)
    h_final = out[S - 1].reshape(1, 1, H)
    return outs, h_final


def encoder_rnn_encode(tokens, hidden, params):
    """Run the GRU encoder over a whole token sequence (loop inside the kernel).

    Returns (outputs (S,1,H), final hidden (1,1,H)).
    """
    gi_table, w_hh_cat = params
    tokens = jnp.asarray(tokens, jnp.int32).reshape(-1)
    return _encode(tokens, hidden, gi_table, w_hh_cat)


def encoder_rnn_forward(token, hidden, params):
    """Exact equivalent of EncoderRNN.forward(input, hidden): one token step.

    Returns (output, hidden), each (1, 1, H); output == hidden for one step.
    """
    tok = jnp.asarray(token, jnp.int32).reshape(1)
    outs, h_new = encoder_rnn_encode(tok, hidden, params)
    return outs.reshape(1, 1, -1), h_new


def _reference_encode(tokens, hidden, emb_table, w_ih, w_hh, b_ih, b_hh):
    """Pure-JAX reference of PyTorch Embedding + GRU over a token sequence."""
    H = hidden.shape[-1]
    h = hidden.reshape(1, H)
    outs = []
    for t in range(tokens.shape[0]):
        x = emb_table[tokens[t]].reshape(1, H)
        gi = x @ w_ih.T + b_ih
        gh = h @ w_hh.T + b_hh
        i_r, i_z, i_n = gi[:, :H], gi[:, H:2 * H], gi[:, 2 * H:]
        h_r, h_z, h_n = gh[:, :H], gh[:, H:2 * H], gh[:, 2 * H:]
        r = jax.nn.sigmoid(i_r + h_r)
        z = jax.nn.sigmoid(i_z + h_z)
        n = jnp.tanh(i_n + r * h_n)
        h = (1.0 - z) * n + z * h
        outs.append(h)
    return jnp.stack(outs).reshape(-1, 1, H), h.reshape(1, 1, H)


if __name__ == "__main__":
    H, V, S = HIDDEN, VOCAB, SEQ
    key = jax.random.PRNGKey(0)
    k_emb, k_wih, k_whh, k_bih, k_bhh, k_tok = jax.random.split(key, 6)

    scale = 1.0 / float(H) ** 0.5
    # Deterministic synthetic parameters (shapes match nn.Embedding / nn.GRU).
    emb_table = jax.random.normal(k_emb, (V, H), dtype=jnp.float32)           # Embedding.weight
    w_ih = jax.random.uniform(k_wih, (3 * H, H), jnp.float32, -scale, scale)  # gru.weight_ih_l0
    w_hh = jax.random.uniform(k_whh, (3 * H, H), jnp.float32, -scale, scale)  # gru.weight_hh_l0
    b_ih = jax.random.uniform(k_bih, (3 * H,), jnp.float32, -scale, scale)    # gru.bias_ih_l0
    b_hh = jax.random.uniform(k_bhh, (3 * H,), jnp.float32, -scale, scale)    # gru.bias_hh_l0

    params = prepare_encoder_params(emb_table, w_ih, w_hh, b_ih, b_hh)
    hidden0 = jnp.zeros((1, 1, H), dtype=jnp.float32)   # EncoderRNN.initHidden()

    # --- Single step: exact EncoderRNN.forward semantics (seq=1, batch=1) ---
    token = 5
    out1, h1 = encoder_rnn_forward(token, hidden0, params)
    out1, h1 = jax.block_until_ready((out1, h1))
    ref_out1, ref_h1 = _reference_encode(jnp.array([token], jnp.int32), hidden0,
                                         emb_table, w_ih, w_hh, b_ih, b_hh)
    assert out1.shape == (1, 1, H) and h1.shape == (1, 1, H)
    assert jnp.allclose(out1, ref_out1, atol=1e-5), "single-step output mismatch"
    assert jnp.allclose(h1, ref_h1, atol=1e-5), "single-step hidden mismatch"

    # --- Full sequence: all timesteps inside one kernel invocation ---
    tokens = jax.random.randint(k_tok, (S,), 0, V, dtype=jnp.int32)
    outs, h_final = encoder_rnn_encode(tokens, hidden0, params)
    outs, h_final = jax.block_until_ready((outs, h_final))
    ref_outs, ref_hf = _reference_encode(tokens, hidden0,
                                         emb_table, w_ih, w_hh, b_ih, b_hh)
    assert outs.shape == (S, 1, H) and h_final.shape == (1, 1, H)
    assert jnp.allclose(outs, ref_outs, atol=1e-5), "sequence outputs mismatch"
    assert jnp.allclose(h_final, ref_hf, atol=1e-5), "final hidden mismatch"

    print("KERNEL_OK")
</pallas_src>

<mosaic_0001>
module attributes {stable_mosaic.version = 11 : i64} {
  func.func @gru_encoder_kernel(%arg0: memref<1x128xf32, #tpu.memory_space<vmem>>, %arg1: memref<32x128xf32, #tpu.memory_space<vmem>>, %arg2: memref<1x32xf32, #tpu.memory_space<vmem>>, %arg3: memref<1x32xf32, #tpu.memory_space<vmem>>) attributes {dimension_semantics = [], scalar_prefetch = 0 : i64, scratch_operands = 0 : i64, tpu.core_type = #tpu.core_type<tc>} {
    %c0 = arith.constant 0 : index
    %c0_0 = arith.constant 0 : index
    %0 = vector.load %arg1[%c0, %c0_0] : memref<32x128xf32, #tpu.memory_space<vmem>>, vector<32x128xf32>
    %c0_1 = arith.constant 0 : index
    %c0_2 = arith.constant 0 : index
    %1 = vector.load %arg2[%c0_1, %c0_2] : memref<1x32xf32, #tpu.memory_space<vmem>>, vector<1x32xf32>
    %c0_3 = arith.constant 0 : index
    %c0_4 = arith.constant 0 : index
    %2 = vector.load %arg0[%c0_3, %c0_4] : memref<1x128xf32, #tpu.memory_space<vmem>>, vector<1x128xf32>
    %cst = arith.constant dense<0.000000e+00> : vector<1x128xf32>
    %3 = tpu.matmul %1, %0, %cst {dimension_numbers = #tpu.dot_dimension_numbers<[1], [0], [0], [1], [0, 0, 1, 1], [], []>} : vector<1x32xf32>, vector<32x128xf32>, vector<1x128xf32> -> vector<1x128xf32>
    %4 = arith.addf %2, %3 : vector<1x128xf32>
    %5 = vector.extract_strided_slice %4 {offsets = [0, 0], sizes = [1, 32], strides = [1, 1]} : vector<1x128xf32> to vector<1x32xf32>
    %6 = arith.negf %5 : vector<1x32xf32>
    %7 = math.exp %6 : vector<1x32xf32>
    %cst_5 = arith.constant 1.000000e+00 : f32
    %8 = vector.broadcast %cst_5 : f32 to vector<1x32xf32>
    %9 = arith.addf %8, %7 : vector<1x32xf32>
    %10 = arith.divf %8, %9 : vector<1x32xf32>
    %11 = vector.extract_strided_slice %4 {offsets = [0, 32], sizes = [1, 32], strides = [1, 1]} : vector<1x128xf32> to vector<1x32xf32>
    %12 = arith.negf %11 : vector<1x32xf32>
    %13 = math.exp %12 : vector<1x32xf32>
    %cst_6 = arith.constant 1.000000e+00 : f32
    %14 = vector.broadcast %cst_6 : f32 to vector<1x32xf32>
    %15 = arith.addf %14, %13 : vector<1x32xf32>
    %16 = arith.divf %14, %15 : vector<1x32xf32>
    %17 = vector.extract_strided_slice %4 {offsets = [0, 64], sizes = [1, 32], strides = [1, 1]} : vector<1x128xf32> to vector<1x32xf32>
    %18 = vector.extract_strided_slice %4 {offsets = [0, 96], sizes = [1, 32], strides = [1, 1]} : vector<1x128xf32> to vector<1x32xf32>
    %19 = arith.mulf %10, %18 : vector<1x32xf32>
    %20 = arith.addf %17, %19 : vector<1x32xf32>
    %21 = math.tanh %20 : vector<1x32xf32>
    %cst_7 = arith.constant 1.000000e+00 : f32
    %22 = vector.broadcast %cst_7 : f32 to vector<1x32xf32>
    %23 = arith.subf %22, %16 : vector<1x32xf32>
    %24 = arith.mulf %23, %21 : vector<1x32xf32>
    %25 = arith.mulf %16, %1 : vector<1x32xf32>
    %26 = arith.addf %24, %25 : vector<1x32xf32>
    %c0_8 = arith.constant 0 : index
    %c0_9 = arith.constant 0 : index
    %27 = vector.load %arg3[%c0_8, %c0_9] : memref<1x32xf32, #tpu.memory_space<vmem>>, vector<1x32xf32>
    tpu.vector_store %arg3[%c0_8, %c0_9], %26 {strides = array<i32>} : memref<1x32xf32, #tpu.memory_space<vmem>>, vector<1x32xf32>,
    return
  }
}

</mosaic_0001>

<llo_original>
// kernel: _encode.1
$region0: #{_encode.1}
  #allocation0 [shape = 'u32[]', space=smem, size = 0x4, offset = 0x4, fixed_abs, tag = 'smem constant byte address 0x4 - core index']
  #allocation1 [shape = 'u32[144,128]{1,0:T(1,128)}', space=vmem, size = 0x12000, scoped, tag = 'internal scratch']
  %s0 = inlined_call_operand.vmem [shape: f32[1,128], index: 0, kind: input, shape index: {}]
  %s1 = inlined_call_operand.vmem [shape: f32[32,128], index: 1, kind: input, shape index: {}]
  %s2 = inlined_call_operand.vmem [shape: f32[1,32], index: 2, kind: input, shape index: {}]
  %s3 = inlined_call_operand.vmem [shape: f32[1,32], index: 3, kind: output, shape index: {}]
  %s4 = sld [smem:[#allocation0]]
  $region22: #{_encode.1} parent=0
    _
  %s6 = ssub.s32 1, %s4
  %s7 = scalar_select 0, %s6, %s4
  // Predicated region
  $region2: #{_encode.1} parent=0 // pred_check
    _
  $region3: #{_encode.1} parent=0 // pred_check_branch
    %9 = sbr.rel (0) target = $region5
  $region4: #{_encode.1} parent=0 // pred_region
    _
  $region5: #{_encode.1} parent=0 // pred_fallthru
    _
  // Predicated region
  $region6: #{_encode.1} parent=0 // pred_check
    _
  $region7: #{_encode.1} parent=0 // pred_check_branch
    %11 = sbr.rel (0) target = $region9
  $region8: #{_encode.1} parent=0 // pred_region
    _
  $region9: #{_encode.1} parent=0 // pred_fallthru
    _
  // Predicated region
  $region10: #{_encode.1} parent=0 // pred_check
    _
  $region11: #{_encode.1} parent=0 // pred_check_branch
    %13 = sbr.rel (0) target = $region13
  $region12: #{_encode.1} parent=0 // pred_region
    _
  $region13: #{_encode.1} parent=0 // pred_fallthru
    _
  %v14 = vld [vmem:[%s1] sm:$0xff]
  %v15 = vld [vmem:[%s1 + $0x8] sm:$0xff]
  %v16 = vld [vmem:[%s1 + $0x10] sm:$0xff]
  %v17 = vld [vmem:[%s1 + $0x18] sm:$0xff]
  %v18 = vld [vmem:[%s2] sm:$0x1]
  %v19 = vld [vmem:[%s0] sm:$0x1]
  %vm20 = vcmask 261120
  %v22 = vsel %vm20, %v18, 0
  %24 = vmatprep.subr.mxu0 0.0
  %25 = vmatpush1.msra.mxu0 %v14
  %26 = vmatprep.subr.mxu0 0.0
  %27 = vmatpush1.msra.mxu0 %v15
  %28 = vmatprep.subr.mxu0 0.0
  %29 = vmatpush1.msra.mxu0 %v16
  %30 = vmatprep.subr.mxu0 0.0
  %31 = vmatpush1.msra.mxu0 %v17
  %32 = vmatprep.subr.mxu0 0.0
  %33 = vmatpush1.msra.mxu0 0.0
  %34 = vmatprep.subr.mxu0 0.0
  %35 = vmatpush1.msra.mxu0 0.0
  %36 = vmatprep.subr.mxu0 0.0
  %37 = vmatpush1.msra.mxu0 0.0
  %38 = vmatprep.subr.mxu0 0.0
  %39 = vmatpush1.msra.mxu0 0.0
  %40 = vmatprep.subr.mxu0 0.0
  %41 = vmatpush1.msra.mxu0 0.0
  %42 = vmatprep.subr.mxu0 0.0
  %43 = vmatpush1.msra.mxu0 0.0
  %44 = vmatprep.subr.mxu0 0.0
  %45 = vmatpush1.msra.mxu0 0.0
  %46 = vmatprep.subr.mxu0 0.0
  %47 = vmatpush1.msra.mxu0 0.0
  %48 = vmatprep.subr.mxu0 0.0
  %49 = vmatpush1.msra.mxu0 0.0
  %50 = vmatprep.subr.mxu0 0.0
  %51 = vmatpush1.msra.mxu0 0.0
  %52 = vmatprep.subr.mxu0 0.0
  %53 = vmatpush1.msra.mxu0 0.0
  %54 = vmatprep.subr.mxu0 0.0
  %55 = vmatpush1.msra.mxu0 0.0
  %56 = vmatprep.subr.mxu0 0.0
  %57 = vmatpush1.msra.mxu0 0.0
  %58 = vmatprep.subr.mxu0 0.0
  %59 = vmatpush1.msra.mxu0 0.0
  %60 = vmatprep.subr.mxu0 0.0
  %61 = vmatpush1.msra.mxu0 0.0
  %62 = vmatprep.subr.mxu0 0.0
  %63 = vmatpush1.msra.mxu0 0.0
  %64 = vmatprep.subr.mxu0 0.0
  %65 = vmatpush1.msra.mxu0 0.0
  %66 = vmatprep.subr.mxu0 0.0
  %67 = vmatpush1.msra.mxu0 0.0
  %68 = vmatprep.subr.mxu0 0.0
  %69 = vmatpush1.msra.mxu0 0.0
  %70 = vmatprep.subr.mxu0 0.0
  %71 = vmatpush1.msra.mxu0 0.0
  %72 = vmatprep.subr.mxu0 0.0
  %73 = vmatpush1.msra.mxu0 0.0
  %74 = vmatprep.subr.mxu0 0.0
  %75 = vmatpush1.msra.mxu0 0.0
  %76 = vmatprep.subr.mxu0 0.0
  %77 = vmatpush1.msra.mxu0 0.0
  %78 = vmatprep.subr.mxu0 0.0
  %79 = vmatpush1.msra.mxu0 0.0
  %80 = vmatprep.subr.mxu0 0.0
  %81 = vmatpush1.msra.mxu0 0.0
  %82 = vmatprep.subr.mxu0 0.0
  %83 = vmatpush1.msra.mxu0 0.0
  %84 = vmatprep.subr.mxu0 0.0
  %85 = vmatpush1.msra.mxu0 0.0
  %86 = vmatprep.subr.mxu0 0.0
  %87 = vmatpush1.msra.mxu0 0.0
  %88 = vmatprep.mubr.f32.mxu0 0.0
  %89 = vmatmul.mubr.f32.gmra.mrb[0].mxu0 %v22
  %v90 = vpop.f32.mrb[0].mxu0
  %v91 = vadd.f32 0.0, %v90
  %v92 = vpop.f32.mrb[0].mxu0
  %93 = vdwg.mxu0
  %v94 = vadd.f32 %v19, %v91
  %v95 = vxor.u32 %v94, 2147483648
  %v96 = vmul.f32 %v95, 1.442695
  %v97 = vpow.pop %v96
  %v98 = vadd.f32 %v97, 1.0
  %v99 = vrcp.pop %v98
  %v100 = vmul.f32 1.0, %v99
  %102 = vrot.lane.b32.xlu0 %v94, 32
  %v103 = vpop.permute.xlu0 %102
  %v105 = vmul.f32 %v100, %v103
  %107 = vrot.lane.b32.xlu0 %v105, 64
  %v108 = vpop.permute.xlu0 %107
  %v110 = vadd.f32 %v94, %v108
  %v111 = vtanh.pop %v110
  %v112 = vsub.f32 1.0, %v100
  %114 = vrot.lane.b32.xlu0 %v111, 96
  %v115 = vpop.permute.xlu0 %114
  %v117 = vmul.f32 %v112, %v115
  %118 = vrot.lane.b32.xlu0 %v18, 32
  %v119 = vpop.permute.xlu0 %118
  %v121 = vmul.f32 %v100, %v119
  %v122 = vadd.f32 %v117, %v121
  %v124 = vlaneseq
  %v125 = vshrl.u32 %v124, 7
  %v126 = vsub.s32 0, %v125
  %v127 = vrot.slane %v122, %v126
  %128 = vrot.lane.b32.xlu0 %v127, 96
  %v129 = vpop.permute.xlu0 %128
  %vm131 = vcmask 253952
  %132 = vst.msk [vmem:[%s3] sm:$0x1] %vm131, %v129
  // Predicated region
  $region14: #{_encode.1} parent=0 // pred_check
    _
  $region15: #{_encode.1} parent=0 // pred_check_branch
    %134 = sbr.rel (0) target = $region17
  $region16: #{_encode.1} parent=0 // pred_region
    _
  $region17: #{_encode.1} parent=0 // pred_fallthru
    _
  // Predicated region
  $region18: #{_encode.1} parent=0 // pred_check
    _
  $region19: #{_encode.1} parent=0 // pred_check_branch
    %136 = sbr.rel (0) target = $region21
  $region20: #{_encode.1} parent=0 // pred_region
    _
  $region21: #{_encode.1} parent=0 // pred_fallthru
    _

</llo_original>
